<compile_context>
chip_gen: v7x
topology: tpu7x:2x2x1
jax: 0.10.0
libtpu: 0.0.40
codegen_flags: <defaults>
</compile_context>

<pallas_src>
import math
import functools

import jax
import jax.numpy as jnp
from jax import lax
from jax.experimental import pallas as pl
from jax.experimental.pallas import tpu as pltpu


def _layernorm(v, w, b, eps=1e-5):
    mu = jnp.mean(v, axis=-1, keepdims=True)
    var = jnp.mean((v - mu) ** 2, axis=-1, keepdims=True)
    return (v - mu) * lax.rsqrt(var + eps) * w + b


def _gelu_exact(v):
    # nn.GELU() default: exact erf-based GELU (parity with the PyTorch module).
    return 0.5 * v * (1.0 + lax.erf(v * (1.0 / math.sqrt(2.0))))


# ------------------- kernel A: LayerNorm1 + fused QKV projection (head-split out) -------------------
def _ln1_qkv_kernel(x_ref, ln1_w_ref, ln1_b_ref, w_qkv_ref, b_qkv_ref,
                    h_ref, q_ref, k_ref, v_ref, *, d_model, n_heads):
    D = d_model
    hd = D // n_heads
    scale = 1.0 / math.sqrt(hd)

    x = x_ref[0]                                                      # (TS, D) f32
    h = _layernorm(x, ln1_w_ref[...], ln1_b_ref[...])                 # f32
    h_ref[0] = h.astype(h_ref.dtype)

    qkv = jnp.dot(h.astype(jnp.bfloat16), w_qkv_ref[...],
                  preferred_element_type=jnp.float32) + b_qkv_ref[...]   # (TS, 3D) f32

    # Fold the 1/sqrt(hd) attention scale into Q once per row (no (TQ,TK) score scaling later).
    q_all = (qkv[:, :D] * jnp.float32(scale)).astype(q_ref.dtype)
    k_all = qkv[:, D:2 * D].astype(k_ref.dtype)
    v_all = qkv[:, 2 * D:3 * D].astype(v_ref.dtype)

    # Head split written directly from the kernel via static lane slices -> (B, H, S, hd)
    # outputs; the wrapper never round-trips QKV through HBM for a reshape/transpose.
    for hh in range(n_heads):
        lo, hi = hh * hd, (hh + 1) * hd
        q_ref[0, hh, :, :] = q_all[:, lo:hi]
        k_ref[0, hh, :, :] = k_all[:, lo:hi]
        v_ref[0, hh, :, :] = v_all[:, lo:hi]


# ------------- kernel B: flash-style causal attention + out-proj + MLP (fused epilogue) -------------
def _attn_mlp_kernel(h_ref, q_ref, k_ref, v_ref,
                     w_out_ref, b_out_ref, ln2_w_ref, ln2_b_ref,
                     w1_ref, b1_ref, w2_ref, b2_ref,
                     o_ref,
                     m_sc, l_sc, acc_sc,
                     *, tq, tk):
    ki = pl.program_id(2)
    nk = pl.num_programs(2)
    q_start = pl.program_id(1) * tq
    k_start = ki * tk

    @pl.when(ki == 0)
    def _init():
        # Large finite negative instead of -inf: no inf-inf / NaN paths possible.
        m_sc[...] = jnp.full(m_sc.shape, -1e30, jnp.float32)
        l_sc[...] = jnp.zeros(l_sc.shape, jnp.float32)
        acc_sc[...] = jnp.zeros(acc_sc.shape, jnp.float32)

    def _update(apply_mask):
        q = q_ref[0]                        # (H, TQ, hd) bf16 (already scaled by 1/sqrt(hd))
        k = k_ref[0]                        # (H, TK, hd) bf16
        v = v_ref[0]                        # (H, TK, hd) bf16

        # All heads in a single batched MXU matmul (batch dim = H).
        s = jnp.einsum("hqd,hkd->hqk", q, k,
                       preferred_element_type=jnp.float32)            # (H, TQ, TK) f32

        if apply_mask:
            # Only diagonal tiles pay for the mask construction (iota + cmp + select).
            row = q_start + lax.broadcasted_iota(jnp.int32, (tq, tk), 0)
            col = k_start + lax.broadcasted_iota(jnp.int32, (tq, tk), 1)
            neg = jnp.where(col > row, jnp.float32(-1e30), jnp.float32(0.0))
            s = s + neg[None, :, :]

        # Online softmax update; m/l are (H, TQ) 2-D scratch (no lane padding).
        m_prev = m_sc[...]
        m_new = jnp.maximum(m_prev, jnp.max(s, axis=-1))
        alpha = jnp.exp(m_prev - m_new)
        p = jnp.exp(s - m_new[..., None])
        l_sc[...] = alpha * l_sc[...] + jnp.sum(p, axis=-1)
        acc_sc[...] = alpha[..., None] * acc_sc[...] + jnp.einsum(
            "hqk,hkd->hqd", p.astype(jnp.bfloat16), v,
            preferred_element_type=jnp.float32)
        m_sc[...] = m_new

    # Tile classification (fully-masked future tiles do nothing; their DMAs are also skipped
    # by the clamped K/V index_map in the wrapper).
    fully_visible = (k_start + (tk - 1)) <= q_start
    on_diagonal = jnp.logical_and(k_start <= q_start + (tq - 1),
                                  (k_start + (tk - 1)) > q_start)

    @pl.when(fully_visible)
    def _interior():
        _update(apply_mask=False)

    @pl.when(on_diagonal)
    def _diag():
        _update(apply_mask=True)

    @pl.when(ki == nk - 1)
    def _finalize():
        # Softmax normalization on the EUP (approximate reciprocal) instead of a VPU divide.
        inv_l = pl.reciprocal(l_sc[...], approx=True)                  # (H, TQ)
        attn = acc_sc[...] * inv_l[..., None]                           # (H, TQ, hd) f32

        # Head-merge folded into the output projection:
        #   out[q, o] = sum_h attn[h, q, :] @ W_out[h, :, o]
        proj = jnp.einsum("hqd,hdo->hqo", attn.astype(jnp.bfloat16), w_out_ref[...],
                          preferred_element_type=jnp.float32)           # (H, TQ, D)
        attn_out = jnp.sum(proj, axis=0) + b_out_ref[...]               # (TQ, D)

        x1 = h_ref[0] + attn_out    # residual stream is norm1(x), matching the PyTorch forward
        h2 = _layernorm(x1, ln2_w_ref[...], ln2_b_ref[...])
        f = jnp.dot(h2.astype(jnp.bfloat16), w1_ref[...],
                    preferred_element_type=jnp.float32) + b1_ref[...]
        f = _gelu_exact(f)
        f = jnp.dot(f.astype(jnp.bfloat16), w2_ref[...],
                    preferred_element_type=jnp.float32) + b2_ref[...]
        o_ref[0] = (x1 + f).astype(o_ref.dtype)


# ------------------------------------- wrapper / tiling policy --------------------------------------
def _vmem_limit_and_cap():
    try:
        cap = int(getattr(pltpu.get_tpu_info(), "vmem_capacity_bytes"))
    except Exception:
        cap = 128 * 1024 * 1024
    if cap <= 64 * 1024 * 1024:          # v7x-class: 64 MiB per TensorCore -> leave headroom
        return 52 * 1024 * 1024, cap
    return 100 * 1024 * 1024, cap        # v5e / v6e: 128 MiB physical


def _choose_tiles(S, *, small_vmem):
    # Generation-aware tile sizes; power-of-two so S_pad is a common multiple of TQ and TK.
    tq_pref = 256 if small_vmem else 512
    tq = min(tq_pref, max(8, pl.next_power_of_2(S)))
    tk = min(256, tq)
    s_pad = ((S + tq - 1) // tq) * tq
    return tq, tk, s_pad


def transformer_decoder_block(x, params, *, n_heads):
    B, S, D = x.shape
    H = n_heads
    assert D % H == 0
    hd = D // H
    d_ff = params["w1_t"].shape[1]

    vmem_limit, vmem_cap = _vmem_limit_and_cap()
    TQ, TK, S_pad = _choose_tiles(S, small_vmem=(vmem_cap <= 64 * 1024 * 1024))
    TS = TQ
    nq, nk = S_pad // TQ, S_pad // TK

    # Pad S to a tile multiple. Padded query rows are dropped at the end; padded key positions
    # (>= S) are always behind every real query, so the causal mask already excludes them.
    if S_pad != S:
        x = jnp.pad(x, ((0, 0), (0, S_pad - S), (0, 0)))

    bf16 = jnp.bfloat16
    w_qkv = params["w_qkv_t"].astype(bf16)                        # (D, 3D)
    w_out3 = params["w_out_t"].reshape(H, hd, D).astype(bf16)     # head-split out-projection
    w1 = params["w1_t"].astype(bf16)
    w2 = params["w2_t"].astype(bf16)

    # Single-buffer every constant-index operand (weights, biases, LN params).
    const = dict(pipeline_mode=pl.Buffered(1))

    # ----------------------- kernel A: LayerNorm1 + fused QKV projection -----------------------
    kernel_a = functools.partial(_ln1_qkv_kernel, d_model=D, n_heads=H)
    cost_a = pl.CostEstimate(
        flops=2 * B * S_pad * D * 3 * D,
        transcendentals=0,
        bytes_accessed=(4 * B * S_pad * D              # x in
                        + 4 * B * S_pad * D            # h out (f32)
                        + 2 * B * S_pad * 3 * D        # q/k/v out (bf16)
                        + 2 * D * 3 * D + 4 * 3 * D))
    h, q, k, v = pl.pallas_call(
        kernel_a,
        out_shape=(jax.ShapeDtypeStruct((B, S_pad, D), jnp.float32),
                   jax.ShapeDtypeStruct((B, H, S_pad, hd), bf16),
                   jax.ShapeDtypeStruct((B, H, S_pad, hd), bf16),
                   jax.ShapeDtypeStruct((B, H, S_pad, hd), bf16)),
        grid=(B, S_pad // TS),
        in_specs=[
            pl.BlockSpec((1, TS, D), lambda b, s: (b, s, 0)),                 # x
            pl.BlockSpec((1, D), lambda b, s: (0, 0), **const),               # ln1 w
            pl.BlockSpec((1, D), lambda b, s: (0, 0), **const),               # ln1 b
            pl.BlockSpec((D, 3 * D), lambda b, s: (0, 0), **const),           # W_qkv (bf16)
            pl.BlockSpec((1, 3 * D), lambda b, s: (0, 0), **const),           # b_qkv
        ],
        out_specs=(pl.BlockSpec((1, TS, D), lambda b, s: (b, s, 0)),
                   pl.BlockSpec((1, H, TS, hd), lambda b, s: (b, 0, s, 0)),
                   pl.BlockSpec((1, H, TS, hd), lambda b, s: (b, 0, s, 0)),
                   pl.BlockSpec((1, H, TS, hd), lambda b, s: (b, 0, s, 0))),
        compiler_params=pltpu.CompilerParams(
            dimension_semantics=("parallel", "parallel"),
            vmem_limit_bytes=vmem_limit),
        cost_estimate=cost_a,
    )(x, params["ln1_w"], params["ln1_b"], w_qkv, params["b_qkv"])

    # ------------- kernel B: flash-style attention + out-proj + MLP, fused per Q tile -------------
    def kv_index_map(b, qi, ki):
        # Clamp to the last causally-needed KV block for this Q tile: fully-masked future KV
        # tiles resolve to an already-resident block index, so no DMA is issued for them.
        last = (qi * TQ + (TQ - 1)) // TK
        return (b, 0, jnp.minimum(ki, last), 0)

    kernel_b = functools.partial(_attn_mlp_kernel, tq=TQ, tk=TK)
    cost_b = pl.CostEstimate(
        # causal attention does ~half of the dense 4*B*S^2*D attention FLOPs
        flops=2 * B * S_pad * S_pad * D + 2 * B * S_pad * D * D + 4 * B * S_pad * D * d_ff,
        transcendentals=B * H * S_pad * S_pad // 2 + B * S_pad * d_ff,
        bytes_accessed=(4 * B * S_pad * D                      # h in
                        + 2 * B * S_pad * D                    # q in
                        + 2 * B * S_pad * D * max(nq, 1)       # k+v streamed (~nq/2 each, causal)
                        + 4 * B * S_pad * D                    # out
                        + 2 * (H * hd * D + 2 * D * d_ff)
                        + 4 * (3 * D + d_ff)))
    out = pl.pallas_call(
        kernel_b,
        out_shape=jax.ShapeDtypeStruct((B, S_pad, D), x.dtype),
        grid=(B, nq, nk),
        in_specs=[
            pl.BlockSpec((1, TQ, D), lambda b, qi, ki: (b, qi, 0)),            # h (residual)
            pl.BlockSpec((1, H, TQ, hd), lambda b, qi, ki: (b, 0, qi, 0)),     # q (per Q tile)
            pl.BlockSpec((1, H, TK, hd), kv_index_map),                        # k (streamed, clamped)
            pl.BlockSpec((1, H, TK, hd), kv_index_map),                        # v (streamed, clamped)
            pl.BlockSpec((H, hd, D), lambda b, qi, ki: (0, 0, 0), **const),    # W_out (head-split)
            pl.BlockSpec((1, D), lambda b, qi, ki: (0, 0), **const),           # b_out
            pl.BlockSpec((1, D), lambda b, qi, ki: (0, 0), **const),           # ln2 w
            pl.BlockSpec((1, D), lambda b, qi, ki: (0, 0), **const),           # ln2 b
            pl.BlockSpec((D, d_ff), lambda b, qi, ki: (0, 0), **const),        # W1 (bf16)
            pl.BlockSpec((1, d_ff), lambda b, qi, ki: (0, 0), **const),        # b1
            pl.BlockSpec((d_ff, D), lambda b, qi, ki: (0, 0), **const),        # W2 (bf16)
            pl.BlockSpec((1, D), lambda b, qi, ki: (0, 0), **const),           # b2
        ],
        out_specs=pl.BlockSpec((1, TQ, D), lambda b, qi, ki: (b, qi, 0)),
        scratch_shapes=[
            pltpu.VMEM((H, TQ), jnp.float32),      # running max  m  (2-D: no lane padding)
            pltpu.VMEM((H, TQ), jnp.float32),      # running sum  l
            pltpu.VMEM((H, TQ, hd), jnp.float32),  # running P·V accumulator
        ],
        compiler_params=pltpu.CompilerParams(
            dimension_semantics=("parallel", "parallel", "arbitrary"),
            vmem_limit_bytes=vmem_limit),
        cost_estimate=cost_b,
    )(h, q, k, v, w_out3, params["b_out"], params["ln2_w"], params["ln2_b"],
      w1, params["b1"], w2, params["b2"])

    return out[:, :S, :] if S_pad != S else out


# --------------------------- pure-JAX reference (f32) for verification ---------------------------
def reference_block(x, params, *, n_heads):
    B, S, D = x.shape
    H, hd = n_heads, D // n_heads
    scale = 1.0 / math.sqrt(hd)

    h = _layernorm(x, params["ln1_w"], params["ln1_b"])
    qkv = h @ params["w_qkv_t"] + params["b_qkv"]
    q, k, v = qkv[..., :D], qkv[..., D:2 * D], qkv[..., 2 * D:]

    def split_heads(t):  # (B,S,D) -> (B,H,S,hd)
        return t.reshape(B, S, H, hd).transpose(0, 2, 1, 3)

    q, k, v = split_heads(q), split_heads(k), split_heads(v)
    mask = jnp.where(jnp.triu(jnp.ones((S, S), bool), 1), -jnp.inf, 0.0)
    scores = jnp.einsum("bhqd,bhkd->bhqk", q, k) * scale + mask
    p = jax.nn.softmax(scores, axis=-1)
    o = jnp.einsum("bhqk,bhkd->bhqd", p, v).transpose(0, 2, 1, 3).reshape(B, S, D)
    attn = o @ params["w_out_t"] + params["b_out"]
    x1 = h + attn
    h2 = _layernorm(x1, params["ln2_w"], params["ln2_b"])
    f = _gelu_exact(h2 @ params["w1_t"] + params["b1"]) @ params["w2_t"] + params["b2"]
    return x1 + f


if __name__ == "__main__":
    B, S = 2, 8
    d_model, d_ff, n_heads = 32, 64, 4

    key = jax.random.PRNGKey(0)
    keys = jax.random.split(key, 9)

    params = {
        "ln1_w": jnp.ones((1, d_model), jnp.float32),
        "ln1_b": jnp.zeros((1, d_model), jnp.float32),
        # stored pre-transposed so kernels compute y = x @ W_t + b
        "w_qkv_t": 0.05 * jax.random.normal(keys[0], (d_model, 3 * d_model), jnp.float32),
        "b_qkv":   0.05 * jax.random.normal(keys[1], (1, 3 * d_model), jnp.float32),
        "w_out_t": 0.05 * jax.random.normal(keys[2], (d_model, d_model), jnp.float32),
        "b_out":   0.05 * jax.random.normal(keys[3], (1, d_model), jnp.float32),
        "ln2_w": jnp.ones((1, d_model), jnp.float32),
        "ln2_b": jnp.zeros((1, d_model), jnp.float32),
        "w1_t": 0.05 * jax.random.normal(keys[4], (d_model, d_ff), jnp.float32),
        "b1":   0.05 * jax.random.normal(keys[5], (1, d_ff), jnp.float32),
        "w2_t": 0.05 * jax.random.normal(keys[6], (d_ff, d_model), jnp.float32),
        "b2":   0.05 * jax.random.normal(keys[7], (1, d_model), jnp.float32),
    }

    x = jax.random.normal(keys[8], (B, S, d_model), jnp.float32)

    out = transformer_decoder_block(x, params, n_heads=n_heads)
    out = jax.block_until_ready(out)

    ref = reference_block(x, params, n_heads=n_heads)
    assert out.shape == (B, S, d_model)
    # bf16 MXU operands + approximate reciprocal -> compare against the f32 reference loosely.
    assert jnp.allclose(out, ref, rtol=2e-2, atol=2e-2), (
        "kernel/reference mismatch: max abs err = "
        f"{float(jnp.max(jnp.abs(out - ref)))}")
    print("KERNEL_OK")
</pallas_src>

<mosaic_0001>
module attributes {stable_mosaic.version = 11 : i64} {
  func.func @_ln1_qkv_kernel(%arg0: i32, %arg1: i32, %arg2: memref<1x8x32xf32, #tpu.memory_space<vmem>>, %arg3: memref<1x32xf32, #tpu.memory_space<vmem>>, %arg4: memref<1x32xf32, #tpu.memory_space<vmem>>, %arg5: memref<32x96xbf16, #tpu.memory_space<vmem>>, %arg6: memref<1x96xf32, #tpu.memory_space<vmem>>, %arg7: memref<1x8x32xf32, #tpu.memory_space<vmem>>, %arg8: memref<1x4x8x8xbf16, #tpu.memory_space<vmem>>, %arg9: memref<1x4x8x8xbf16, #tpu.memory_space<vmem>>, %arg10: memref<1x4x8x8xbf16, #tpu.memory_space<vmem>>) attributes {dimension_semantics = [#tpu.dimension_semantics<parallel>, #tpu.dimension_semantics<parallel>], iteration_bounds = array<i64: 2, 1>, scalar_prefetch = 0 : i64, scratch_operands = 0 : i64, tpu.core_type = #tpu.core_type<tc>, window_params = [{transform_indices = @transform_0, window_bounds = array<i64: 1, 8, 32>}, {pipeline_mode = #tpu.pipeline_mode<synchronous>, transform_indices = @transform_1, window_bounds = array<i64: 1, 32>}, {pipeline_mode = #tpu.pipeline_mode<synchronous>, transform_indices = @transform_2, window_bounds = array<i64: 1, 32>}, {pipeline_mode = #tpu.pipeline_mode<synchronous>, transform_indices = @transform_3, window_bounds = array<i64: 32, 96>}, {pipeline_mode = #tpu.pipeline_mode<synchronous>, transform_indices = @transform_4, window_bounds = array<i64: 1, 96>}, {transform_indices = @transform_5, window_bounds = array<i64: 1, 8, 32>}, {transform_indices = @transform_6, window_bounds = array<i64: 1, 4, 8, 8>}, {transform_indices = @transform_7, window_bounds = array<i64: 1, 4, 8, 8>}, {transform_indices = @transform_8, window_bounds = array<i64: 1, 4, 8, 8>}]} {
    %c0 = arith.constant 0 : index
    %c0_0 = arith.constant 0 : index
    %c0_1 = arith.constant 0 : index
    %0 = vector.load %arg2[%c0, %c0_0, %c0_1] : memref<1x8x32xf32, #tpu.memory_space<vmem>>, vector<1x8x32xf32>
    %1 = vector.shape_cast %0 : vector<1x8x32xf32> to vector<8x32xf32>
    %c0_2 = arith.constant 0 : index
    %c0_3 = arith.constant 0 : index
    %2 = vector.load %arg3[%c0_2, %c0_3] : memref<1x32xf32, #tpu.memory_space<vmem>>, vector<1x32xf32>
    %c0_4 = arith.constant 0 : index
    %c0_5 = arith.constant 0 : index
    %3 = vector.load %arg4[%c0_4, %c0_5] : memref<1x32xf32, #tpu.memory_space<vmem>>, vector<1x32xf32>
    %cst = arith.constant dense<0.000000e+00> : vector<8xf32>
    %4 = vector.multi_reduction <add>, %1, %cst [1] : vector<8x32xf32> to vector<8xf32>
    %5 = vector.shape_cast %4 : vector<8xf32> to vector<8x1xf32>
    %cst_6 = arith.constant 3.200000e+01 : f32
    %6 = vector.broadcast %cst_6 : f32 to vector<8x1xf32>
    %7 = arith.divf %5, %6 : vector<8x1xf32>
    %8 = vector.broadcast %7 : vector<8x1xf32> to vector<8x32xf32>
    %9 = arith.subf %1, %8 : vector<8x32xf32>
    %10 = arith.mulf %9, %9 : vector<8x32xf32>
    %cst_7 = arith.constant dense<0.000000e+00> : vector<8xf32>
    %11 = vector.multi_reduction <add>, %10, %cst_7 [1] : vector<8x32xf32> to vector<8xf32>
    %12 = vector.shape_cast %11 : vector<8xf32> to vector<8x1xf32>
    %cst_8 = arith.constant 3.200000e+01 : f32
    %13 = vector.broadcast %cst_8 : f32 to vector<8x1xf32>
    %14 = arith.divf %12, %13 : vector<8x1xf32>
    %15 = vector.broadcast %7 : vector<8x1xf32> to vector<8x32xf32>
    %16 = arith.subf %1, %15 : vector<8x32xf32>
    %cst_9 = arith.constant 9.99999974E-6 : f32
    %17 = vector.broadcast %cst_9 : f32 to vector<8x1xf32>
    %18 = arith.addf %14, %17 : vector<8x1xf32>
    %19 = math.rsqrt %18 : vector<8x1xf32>
    %20 = vector.broadcast %19 : vector<8x1xf32> to vector<8x32xf32>
    %21 = arith.mulf %16, %20 : vector<8x32xf32>
    %22 = vector.broadcast %2 : vector<1x32xf32> to vector<8x32xf32>
    %23 = arith.mulf %21, %22 : vector<8x32xf32>
    %24 = vector.broadcast %3 : vector<1x32xf32> to vector<8x32xf32>
    %25 = arith.addf %23, %24 : vector<8x32xf32>
    %c0_10 = arith.constant 0 : index
    %c0_11 = arith.constant 0 : index
    %c0_12 = arith.constant 0 : index
    %26 = vector.load %arg7[%c0_10, %c0_11, %c0_12] : memref<1x8x32xf32, #tpu.memory_space<vmem>>, vector<1x8x32xf32>
    %27 = vector.shape_cast %26 : vector<1x8x32xf32> to vector<8x32xf32>
    %28 = vector.shape_cast %25 : vector<8x32xf32> to vector<1x8x32xf32>
    tpu.vector_store %arg7[%c0_10, %c0_11, %c0_12], %28 {strides = array<i32>} : memref<1x8x32xf32, #tpu.memory_space<vmem>>, vector<1x8x32xf32>,
    %29 = arith.truncf %25 : vector<8x32xf32> to vector<8x32xbf16>
    %c0_13 = arith.constant 0 : index
    %c0_14 = arith.constant 0 : index
    %30 = vector.load %arg5[%c0_13, %c0_14] : memref<32x96xbf16, #tpu.memory_space<vmem>>, vector<32x96xbf16>
    %cst_15 = arith.constant dense<0.000000e+00> : vector<8x96xf32>
    %31 = tpu.matmul %29, %30, %cst_15 {dimension_numbers = #tpu.dot_dimension_numbers<[1], [0], [0], [1], [0, 0, 1, 1], [], []>} : vector<8x32xbf16>, vector<32x96xbf16>, vector<8x96xf32> -> vector<8x96xf32>
    %c0_16 = arith.constant 0 : index
    %c0_17 = arith.constant 0 : index
    %32 = vector.load %arg6[%c0_16, %c0_17] : memref<1x96xf32, #tpu.memory_space<vmem>>, vector<1x96xf32>
    %33 = vector.broadcast %32 : vector<1x96xf32> to vector<8x96xf32>
    %34 = arith.addf %31, %33 : vector<8x96xf32>
    %35 = vector.extract_strided_slice %34 {offsets = [0, 0], sizes = [8, 32], strides = [1, 1]} : vector<8x96xf32> to vector<8x32xf32>
    %cst_18 = arith.constant 0.353553385 : f32
    %36 = vector.broadcast %cst_18 : f32 to vector<8x32xf32>
    %37 = arith.mulf %35, %36 : vector<8x32xf32>
    %38 = arith.truncf %37 : vector<8x32xf32> to vector<8x32xbf16>
    %39 = vector.extract_strided_slice %34 {offsets = [0, 32], sizes = [8, 32], strides = [1, 1]} : vector<8x96xf32> to vector<8x32xf32>
    %40 = arith.truncf %39 : vector<8x32xf32> to vector<8x32xbf16>
    %41 = vector.extract_strided_slice %34 {offsets = [0, 64], sizes = [8, 32], strides = [1, 1]} : vector<8x96xf32> to vector<8x32xf32>
    %42 = arith.truncf %41 : vector<8x32xf32> to vector<8x32xbf16>
    %43 = vector.extract_strided_slice %38 {offsets = [0, 0], sizes = [8, 8], strides = [1, 1]} : vector<8x32xbf16> to vector<8x8xbf16>
    %c0_19 = arith.constant 0 : index
    %c0_20 = arith.constant 0 : index
    %c0_21 = arith.constant 0 : index
    %c0_22 = arith.constant 0 : index
    %44 = vector.load %arg8[%c0_19, %c0_20, %c0_21, %c0_22] : memref<1x4x8x8xbf16, #tpu.memory_space<vmem>>, vector<1x1x8x8xbf16>
    %45 = vector.shape_cast %44 : vector<1x1x8x8xbf16> to vector<8x8xbf16>
    %46 = vector.shape_cast %43 : vector<8x8xbf16> to vector<1x1x8x8xbf16>
    tpu.vector_store %arg8[%c0_19, %c0_20, %c0_21, %c0_22], %46 {strides = array<i32>} : memref<1x4x8x8xbf16, #tpu.memory_space<vmem>>, vector<1x1x8x8xbf16>,
    %47 = vector.extract_strided_slice %40 {offsets = [0, 0], sizes = [8, 8], strides = [1, 1]} : vector<8x32xbf16> to vector<8x8xbf16>
    %c0_23 = arith.constant 0 : index
    %c0_24 = arith.constant 0 : index
    %c0_25 = arith.constant 0 : index
    %c0_26 = arith.constant 0 : index
    %48 = vector.load %arg9[%c0_23, %c0_24, %c0_25, %c0_26] : memref<1x4x8x8xbf16, #tpu.memory_space<vmem>>, vector<1x1x8x8xbf16>
    %49 = vector.shape_cast %48 : vector<1x1x8x8xbf16> to vector<8x8xbf16>
    %50 = vector.shape_cast %47 : vector<8x8xbf16> to vector<1x1x8x8xbf16>
    tpu.vector_store %arg9[%c0_23, %c0_24, %c0_25, %c0_26], %50 {strides = array<i32>} : memref<1x4x8x8xbf16, #tpu.memory_space<vmem>>, vector<1x1x8x8xbf16>,
    %51 = vector.extract_strided_slice %42 {offsets = [0, 0], sizes = [8, 8], strides = [1, 1]} : vector<8x32xbf16> to vector<8x8xbf16>
    %c0_27 = arith.constant 0 : index
    %c0_28 = arith.constant 0 : index
    %c0_29 = arith.constant 0 : index
    %c0_30 = arith.constant 0 : index
    %52 = vector.load %arg10[%c0_27, %c0_28, %c0_29, %c0_30] : memref<1x4x8x8xbf16, #tpu.memory_space<vmem>>, vector<1x1x8x8xbf16>
    %53 = vector.shape_cast %52 : vector<1x1x8x8xbf16> to vector<8x8xbf16>
    %54 = vector.shape_cast %51 : vector<8x8xbf16> to vector<1x1x8x8xbf16>
    tpu.vector_store %arg10[%c0_27, %c0_28, %c0_29, %c0_30], %54 {strides = array<i32>} : memref<1x4x8x8xbf16, #tpu.memory_space<vmem>>, vector<1x1x8x8xbf16>,
    %55 = vector.extract_strided_slice %38 {offsets = [0, 8], sizes = [8, 8], strides = [1, 1]} : vector<8x32xbf16> to vector<8x8xbf16>
    %c0_31 = arith.constant 0 : index
    %c1 = arith.constant 1 : index
    %c0_32 = arith.constant 0 : index
    %c0_33 = arith.constant 0 : index
    %56 = vector.load %arg8[%c0_31, %c1, %c0_32, %c0_33] : memref<1x4x8x8xbf16, #tpu.memory_space<vmem>>, vector<1x1x8x8xbf16>
    %57 = vector.shape_cast %56 : vector<1x1x8x8xbf16> to vector<8x8xbf16>
    %58 = vector.shape_cast %55 : vector<8x8xbf16> to vector<1x1x8x8xbf16>
    tpu.vector_store %arg8[%c0_31, %c1, %c0_32, %c0_33], %58 {strides = array<i32>} : memref<1x4x8x8xbf16, #tpu.memory_space<vmem>>, vector<1x1x8x8xbf16>,
    %59 = vector.extract_strided_slice %40 {offsets = [0, 8], sizes = [8, 8], strides = [1, 1]} : vector<8x32xbf16> to vector<8x8xbf16>
    %c0_34 = arith.constant 0 : index
    %c1_35 = arith.constant 1 : index
    %c0_36 = arith.constant 0 : index
    %c0_37 = arith.constant 0 : index
    %60 = vector.load %arg9[%c0_34, %c1_35, %c0_36, %c0_37] : memref<1x4x8x8xbf16, #tpu.memory_space<vmem>>, vector<1x1x8x8xbf16>
    %61 = vector.shape_cast %60 : vector<1x1x8x8xbf16> to vector<8x8xbf16>
    %62 = vector.shape_cast %59 : vector<8x8xbf16> to vector<1x1x8x8xbf16>
    tpu.vector_store %arg9[%c0_34, %c1_35, %c0_36, %c0_37], %62 {strides = array<i32>} : memref<1x4x8x8xbf16, #tpu.memory_space<vmem>>, vector<1x1x8x8xbf16>,
    %63 = vector.extract_strided_slice %42 {offsets = [0, 8], sizes = [8, 8], strides = [1, 1]} : vector<8x32xbf16> to vector<8x8xbf16>
    %c0_38 = arith.constant 0 : index
    %c1_39 = arith.constant 1 : index
    %c0_40 = arith.constant 0 : index
    %c0_41 = arith.constant 0 : index
    %64 = vector.load %arg10[%c0_38, %c1_39, %c0_40, %c0_41] : memref<1x4x8x8xbf16, #tpu.memory_space<vmem>>, vector<1x1x8x8xbf16>
    %65 = vector.shape_cast %64 : vector<1x1x8x8xbf16> to vector<8x8xbf16>
    %66 = vector.shape_cast %63 : vector<8x8xbf16> to vector<1x1x8x8xbf16>
    tpu.vector_store %arg10[%c0_38, %c1_39, %c0_40, %c0_41], %66 {strides = array<i32>} : memref<1x4x8x8xbf16, #tpu.memory_space<vmem>>, vector<1x1x8x8xbf16>,
    %67 = vector.extract_strided_slice %38 {offsets = [0, 16], sizes = [8, 8], strides = [1, 1]} : vector<8x32xbf16> to vector<8x8xbf16>
    %c0_42 = arith.constant 0 : index
    %c2 = arith.constant 2 : index
    %c0_43 = arith.constant 0 : index
    %c0_44 = arith.constant 0 : index
    %68 = vector.load %arg8[%c0_42, %c2, %c0_43, %c0_44] : memref<1x4x8x8xbf16, #tpu.memory_space<vmem>>, vector<1x1x8x8xbf16>
    %69 = vector.shape_cast %68 : vector<1x1x8x8xbf16> to vector<8x8xbf16>
    %70 = vector.shape_cast %67 : vector<8x8xbf16> to vector<1x1x8x8xbf16>
    tpu.vector_store %arg8[%c0_42, %c2, %c0_43, %c0_44], %70 {strides = array<i32>} : memref<1x4x8x8xbf16, #tpu.memory_space<vmem>>, vector<1x1x8x8xbf16>,
    %71 = vector.extract_strided_slice %40 {offsets = [0, 16], sizes = [8, 8], strides = [1, 1]} : vector<8x32xbf16> to vector<8x8xbf16>
    %c0_45 = arith.constant 0 : index
    %c2_46 = arith.constant 2 : index
    %c0_47 = arith.constant 0 : index
    %c0_48 = arith.constant 0 : index
    %72 = vector.load %arg9[%c0_45, %c2_46, %c0_47, %c0_48] : memref<1x4x8x8xbf16, #tpu.memory_space<vmem>>, vector<1x1x8x8xbf16>
    %73 = vector.shape_cast %72 : vector<1x1x8x8xbf16> to vector<8x8xbf16>
    %74 = vector.shape_cast %71 : vector<8x8xbf16> to vector<1x1x8x8xbf16>
    tpu.vector_store %arg9[%c0_45, %c2_46, %c0_47, %c0_48], %74 {strides = array<i32>} : memref<1x4x8x8xbf16, #tpu.memory_space<vmem>>, vector<1x1x8x8xbf16>,
    %75 = vector.extract_strided_slice %42 {offsets = [0, 16], sizes = [8, 8], strides = [1, 1]} : vector<8x32xbf16> to vector<8x8xbf16>
    %c0_49 = arith.constant 0 : index
    %c2_50 = arith.constant 2 : index
    %c0_51 = arith.constant 0 : index
    %c0_52 = arith.constant 0 : index
    %76 = vector.load %arg10[%c0_49, %c2_50, %c0_51, %c0_52] : memref<1x4x8x8xbf16, #tpu.memory_space<vmem>>, vector<1x1x8x8xbf16>
    %77 = vector.shape_cast %76 : vector<1x1x8x8xbf16> to vector<8x8xbf16>
    %78 = vector.shape_cast %75 : vector<8x8xbf16> to vector<1x1x8x8xbf16>
    tpu.vector_store %arg10[%c0_49, %c2_50, %c0_51, %c0_52], %78 {strides = array<i32>} : memref<1x4x8x8xbf16, #tpu.memory_space<vmem>>, vector<1x1x8x8xbf16>,
    %79 = vector.extract_strided_slice %38 {offsets = [0, 24], sizes = [8, 8], strides = [1, 1]} : vector<8x32xbf16> to vector<8x8xbf16>
    %c0_53 = arith.constant 0 : index
    %c3 = arith.constant 3 : index
    %c0_54 = arith.constant 0 : index
    %c0_55 = arith.constant 0 : index
    %80 = vector.load %arg8[%c0_53, %c3, %c0_54, %c0_55] : memref<1x4x8x8xbf16, #tpu.memory_space<vmem>>, vector<1x1x8x8xbf16>
    %81 = vector.shape_cast %80 : vector<1x1x8x8xbf16> to vector<8x8xbf16>
    %82 = vector.shape_cast %79 : vector<8x8xbf16> to vector<1x1x8x8xbf16>
    tpu.vector_store %arg8[%c0_53, %c3, %c0_54, %c0_55], %82 {strides = array<i32>} : memref<1x4x8x8xbf16, #tpu.memory_space<vmem>>, vector<1x1x8x8xbf16>,
    %83 = vector.extract_strided_slice %40 {offsets = [0, 24], sizes = [8, 8], strides = [1, 1]} : vector<8x32xbf16> to vector<8x8xbf16>
    %c0_56 = arith.constant 0 : index
    %c3_57 = arith.constant 3 : index
    %c0_58 = arith.constant 0 : index
    %c0_59 = arith.constant 0 : index
    %84 = vector.load %arg9[%c0_56, %c3_57, %c0_58, %c0_59] : memref<1x4x8x8xbf16, #tpu.memory_space<vmem>>, vector<1x1x8x8xbf16>
    %85 = vector.shape_cast %84 : vector<1x1x8x8xbf16> to vector<8x8xbf16>
    %86 = vector.shape_cast %83 : vector<8x8xbf16> to vector<1x1x8x8xbf16>
    tpu.vector_store %arg9[%c0_56, %c3_57, %c0_58, %c0_59], %86 {strides = array<i32>} : memref<1x4x8x8xbf16, #tpu.memory_space<vmem>>, vector<1x1x8x8xbf16>,
    %87 = vector.extract_strided_slice %42 {offsets = [0, 24], sizes = [8, 8], strides = [1, 1]} : vector<8x32xbf16> to vector<8x8xbf16>
    %c0_60 = arith.constant 0 : index
    %c3_61 = arith.constant 3 : index
    %c0_62 = arith.constant 0 : index
    %c0_63 = arith.constant 0 : index
    %88 = vector.load %arg10[%c0_60, %c3_61, %c0_62, %c0_63] : memref<1x4x8x8xbf16, #tpu.memory_space<vmem>>, vector<1x1x8x8xbf16>
    %89 = vector.shape_cast %88 : vector<1x1x8x8xbf16> to vector<8x8xbf16>
    %90 = vector.shape_cast %87 : vector<8x8xbf16> to vector<1x1x8x8xbf16>
    tpu.vector_store %arg10[%c0_60, %c3_61, %c0_62, %c0_63], %90 {strides = array<i32>} : memref<1x4x8x8xbf16, #tpu.memory_space<vmem>>, vector<1x1x8x8xbf16>,
    return
  }
  func.func @transform_0(%arg0: i32, %arg1: i32) -> (i32, i32, i32) {
    %c0_i32 = arith.constant 0 : i32
    %c0_i32_0 = arith.constant 0 : i32
    return %arg0, %arg1, %c0_i32 : i32, i32, i32
  }
  func.func @transform_1(%arg0: i32, %arg1: i32) -> (i32, i32) {
    %c0_i32 = arith.constant 0 : i32
    %c0_i32_0 = arith.constant 0 : i32
    %c0_i32_1 = arith.constant 0 : i32
    return %c0_i32, %c0_i32_0 : i32, i32
  }
  func.func @transform_2(%arg0: i32, %arg1: i32) -> (i32, i32) {
    %c0_i32 = arith.constant 0 : i32
    %c0_i32_0 = arith.constant 0 : i32
    %c0_i32_1 = arith.constant 0 : i32
    return %c0_i32, %c0_i32_0 : i32, i32
  }
  func.func @transform_3(%arg0: i32, %arg1: i32) -> (i32, i32) {
    %c0_i32 = arith.constant 0 : i32
    %c0_i32_0 = arith.constant 0 : i32
    %c0_i32_1 = arith.constant 0 : i32
    return %c0_i32, %c0_i32_0 : i32, i32
  }
  func.func @transform_4(%arg0: i32, %arg1: i32) -> (i32, i32) {
    %c0_i32 = arith.constant 0 : i32
    %c0_i32_0 = arith.constant 0 : i32
    %c0_i32_1 = arith.constant 0 : i32
    return %c0_i32, %c0_i32_0 : i32, i32
  }
  func.func @transform_5(%arg0: i32, %arg1: i32) -> (i32, i32, i32) {
    %c0_i32 = arith.constant 0 : i32
    %c0_i32_0 = arith.constant 0 : i32
    return %arg0, %arg1, %c0_i32 : i32, i32, i32
  }
  func.func @transform_6(%arg0: i32, %arg1: i32) -> (i32, i32, i32, i32) {
    %c0_i32 = arith.constant 0 : i32
    %c0_i32_0 = arith.constant 0 : i32
    %c0_i32_1 = arith.constant 0 : i32
    return %arg0, %c0_i32, %arg1, %c0_i32_0 : i32, i32, i32, i32
  }
  func.func @transform_7(%arg0: i32, %arg1: i32) -> (i32, i32, i32, i32) {
    %c0_i32 = arith.constant 0 : i32
    %c0_i32_0 = arith.constant 0 : i32
    %c0_i32_1 = arith.constant 0 : i32
    return %arg0, %c0_i32, %arg1, %c0_i32_0 : i32, i32, i32, i32
  }
  func.func @transform_8(%arg0: i32, %arg1: i32) -> (i32, i32, i32, i32) {
    %c0_i32 = arith.constant 0 : i32
    %c0_i32_0 = arith.constant 0 : i32
    %c0_i32_1 = arith.constant 0 : i32
    return %arg0, %c0_i32, %arg1, %c0_i32_0 : i32, i32, i32, i32
  }
}

</mosaic_0001>

<llo_original>
// kernel: tpu_custom_call.1
$region0: #{tpu_custom_call.1}
  #allocation0 [shape = 'u32[]', space=smem, size = 0x4, offset = 0x4, fixed_abs, tag = 'smem constant byte address 0x4 - core index']
  #allocation1 [shape = 'u32[144,128]{1,0:T(1,128)}', space=vmem, size = 0x12000, scoped, tag = 'internal scratch']
  %s0 = inlined_call_operand.hbm [shape: f32[2,8,32], index: 0, kind: input, shape index: {}]
  %s1 = inlined_call_operand.hbm [shape: f32[1,32], index: 1, kind: input, shape index: {}]
  %s2 = inlined_call_operand.hbm [shape: f32[1,32], index: 2, kind: input, shape index: {}]
  %s3 = inlined_call_operand.hbm [shape: bf16[32,96], index: 3, kind: input, shape index: {}]
  %s4 = inlined_call_operand.hbm [shape: f32[1,96], index: 4, kind: input, shape index: {}]
  %s5 = inlined_call_operand.hbm [shape: f32[2,8,32], index: 5, kind: output, shape index: {0}]
  %s6 = inlined_call_operand.hbm [shape: bf16[2,4,8,8], index: 6, kind: output, shape index: {1}]
  %s7 = inlined_call_operand.hbm [shape: bf16[2,4,8,8], index: 7, kind: output, shape index: {2}]
  %s8 = inlined_call_operand.hbm [shape: bf16[2,4,8,8], index: 8, kind: output, shape index: {3}]
  %9 = xla_tuple %s5, %s6, %s7, %s8
  %s10 = sld [smem:[#allocation0]]
  $region97: #{tpu_custom_call.1} parent=0
    _
  %s12 = ssub.s32 1, %s10
  %s13 = scalar_select 0, %s12, %s10
  $region1: #{tpu_custom_call.1} parent=0
    #allocation2 [shape = 'u8[8192]{0}', space=vmem, size = 0x2000, scoped, tag = 'input window, operand 0']
    #allocation3 [shape = 's32[2]{0}', space=sflag, size = 0x8, scoped, tag = 'scoped memory for tpu_custom_call.1']
    #allocation4 [shape = 's32[2]{0}', space=sflag, size = 0x8, scoped, tag = 'scoped memory for tpu_custom_call.1']
    #allocation5 [shape = 'u8[512]{0}', space=vmem, size = 0x400, scoped, tag = 'input window, operand 1, single buffered']
    #allocation6 [shape = 's32[1]{0}', space=sflag, size = 0x4, scoped, tag = 'scoped memory for tpu_custom_call.1']
    #allocation7 [shape = 'u8[512]{0}', space=vmem, size = 0x400, scoped, tag = 'input window, operand 2, single buffered']
    #allocation8 [shape = 'u8[8192]{0}', space=vmem, size = 0x2000, scoped, tag = 'input window, operand 3, single buffered']
    #allocation9 [shape = 's32[1]{0}', space=sflag, size = 0x4, scoped, tag = 'scoped memory for tpu_custom_call.1']
    #allocation10 [shape = 'u8[512]{0}', space=vmem, size = 0x400, scoped, tag = 'input window, operand 4, single buffered']
    #allocation11 [shape = 'u8[8192]{0}', space=vmem, size = 0x2000, scoped, tag = 'output window, operand 0']
    #allocation12 [shape = 'u8[16384]{0}', space=vmem, size = 0x4000, scoped, tag = 'output window, operand 1']
    #allocation13 [shape = 's32[2]{0}', space=sflag, size = 0x8, scoped, tag = 'scoped memory for tpu_custom_call.1']
    #allocation14 [shape = 'u8[16384]{0}', space=vmem, size = 0x4000, scoped, tag = 'output window, operand 2']
    #allocation15 [shape = 'u8[16384]{0}', space=vmem, size = 0x4000, scoped, tag = 'output window, operand 3']
    #allocation16 [shape = 's32[2]{0}', space=sflag, size = 0x8, scoped, tag = 'scoped memory for tpu_custom_call.1']
    %14 = vsyncpa [#allocation3], 0
    %s15 = scalar_lea.sflag [#allocation3], 1
    %16 = vsyncpa %s15, 0
    %17 = vsyncpa [#allocation6], 0
    %18 = vsyncpa [#allocation9], 0
    %19 = vsyncpa [#allocation4], 0
    %s20 = scalar_lea.sflag [#allocation4], 1
    %21 = vsyncpa %s20, 0
    %22 = vsyncpa [#allocation13], 0
    %s23 = scalar_lea.sflag [#allocation13], 1
    %24 = vsyncpa %s23, 0
    %25 = vsyncpa [#allocation16], 0
    %s26 = scalar_lea.sflag [#allocation16], 1
    %27 = vsyncpa %s26, 0
    loop: start=0, step=1, limit=4
    $region2: #{tpu_custom_call.1} parent=1 // loop_pre_header
      _
    $region3: #{tpu_custom_call.1} parent=1 // loop_header
      %s29 = sphi 0, %s33
      %p30 = scmp.ge.s32.totalorder %s29, 4
      %s36 = sphi 0, %s48
      %s37 = sphi 0, %s44
      %s38 = sphi 0, %s36
      %s39 = sphi 0, %s37
      %s40 = sphi 0, %s38
      %s41 = sphi 0, %s39
      %s53 = sphi 0, %s55
      %s56 = sphi 0, %s53
      %s57 = sphi 0, %s56
      %s73 = sphi 0, %s57
      %s77 = sphi 0, %s77
      %s79 = sphi 0, %s77
      %s80 = sphi 0, %s79
      %s94 = sphi 0, %s80
      %s98 = sphi 0, %s98
      %s100 = sphi 0, %s98
      %s101 = sphi 0, %s100
      %s115 = sphi 0, %s101
      %s119 = sphi 0, %s119
      %s121 = sphi 0, %s119
      %s122 = sphi 0, %s121
      %s136 = sphi 0, %s122
      %s140 = sphi 0, %s140
      %s142 = sphi 0, %s140
      %s143 = sphi 0, %s142
      %s157 = sphi 0, %s143
      %s165 = sphi 0, %s167
      %s168 = sphi 0, %s165
      %s169 = sphi 0, %s168
      %s185 = sphi 0, %s169
      %s193 = sphi 0, %s195
      %s196 = sphi 0, %s193
      %s197 = sphi 0, %s196
      %s213 = sphi 0, %s197
      %s221 = sphi 0, %s223
      %s224 = sphi 0, %s221
      %s225 = sphi 0, %s224
      %s241 = sphi 0, %s225
      %s249 = sphi 0, %s251
      %s252 = sphi 0, %s249
      %s253 = sphi 0, %s252
      %s269 = sphi 0, %s253
    $region4: #{tpu_custom_call.1} parent=1 // loop_header_branch
      %32 = sbr.rel (%p30) target = $region8
    $region5: #{tpu_custom_call.1} parent=1 // loop_body
      %s34 = ssub.s32 %s29, 1
      %s35 = ssub.s32 %s29, 2
      %s42 = sadd.s32 1, %s37
      %p43 = scmp.ge.s32.totalorder %s42, 1
      %s44 = scalar_select %p43, 0, %s42
      %s45 = sadd.s32 1, %s36
      %s46 = scalar_select %p43, %s45, %s36
      %p47 = scmp.ge.s32.totalorder %s46, 2
      %s48 = scalar_select %p47, 0, %s46
      %s49 = ssub.s32 %s36, %s48
      %s50 = ssub.s32 %s37, %s44
      %s51 = sor.u32 %s49, %s50
      %p52 = scmp.eq.s32.totalorder %s51, 0
      %s54 = sadd.s32 %s53, 1
      %s55 = scalar_select %p52, %s53, %s54
      %p58 = pneg %p52
      %p59 = scmp.eq.s32.totalorder %s29, 1
      %p60 = por %p58, %p59
      %p61 = scmp.ne.s32.totalorder %s53, %s56
      %p62 = scmp.eq.s32.totalorder %s29, 0
      %p63 = por %p61, %p62
      %p64 = scmp.ne.s32.totalorder %s53, %s56
      %p65 = scmp.eq.s32.totalorder %s34, 1
      %p66 = por %p64, %p65
      %p67 = scmp.ne.s32.totalorder %s56, %s57
      %p68 = scmp.eq.s32.totalorder %s34, 0
      %p69 = por %p67, %p68
      %p70 = scmp.ne.s32.totalorder %s56, %s57
      %p71 = scmp.eq.s32.totalorder %s35, 1
      %p72 = por %p70, %p71
      %p74 = scmp.ne.s32.totalorder %s57, %s73
      %p75 = scmp.eq.s32.totalorder %s35, 0
      %p76 = por %p74, %p75
      %s78 = sadd.s32 %s77, 1
      %p81 = scmp.eq.s32.totalorder %s29, 1
      %p82 = scmp.ne.s32.totalorder %s77, %s79
      %p83 = scmp.eq.s32.totalorder %s29, 0
      %p84 = por %p82, %p83
      %p85 = scmp.ne.s32.totalorder %s77, %s79
      %p86 = scmp.eq.s32.totalorder %s34, 1
      %p87 = por %p85, %p86
      %p88 = scmp.ne.s32.totalorder %s79, %s80
      %p89 = scmp.eq.s32.totalorder %s34, 0
      %p90 = por %p88, %p89
      %p91 = scmp.ne.s32.totalorder %s79, %s80
      %p92 = scmp.eq.s32.totalorder %s35, 1
      %p93 = por %p91, %p92
      %p95 = scmp.ne.s32.totalorder %s80, %s94
      %p96 = scmp.eq.s32.totalorder %s35, 0
      %p97 = por %p95, %p96
      %s99 = sadd.s32 %s98, 1
      %p102 = scmp.eq.s32.totalorder %s29, 1
      %p103 = scmp.ne.s32.totalorder %s98, %s100
      %p104 = scmp.eq.s32.totalorder %s29, 0
      %p105 = por %p103, %p104
      %p106 = scmp.ne.s32.totalorder %s98, %s100
      %p107 = scmp.eq.s32.totalorder %s34, 1
      %p108 = por %p106, %p107
      %p109 = scmp.ne.s32.totalorder %s100, %s101
      %p110 = scmp.eq.s32.totalorder %s34, 0
      %p111 = por %p109, %p110
      %p112 = scmp.ne.s32.totalorder %s100, %s101
      %p113 = scmp.eq.s32.totalorder %s35, 1
      %p114 = por %p112, %p113
      %p116 = scmp.ne.s32.totalorder %s101, %s115
      %p117 = scmp.eq.s32.totalorder %s35, 0
      %p118 = por %p116, %p117
      %s120 = sadd.s32 %s119, 1
      %p123 = scmp.eq.s32.totalorder %s29, 1
      %p124 = scmp.ne.s32.totalorder %s119, %s121
      %p125 = scmp.eq.s32.totalorder %s29, 0
      %p126 = por %p124, %p125
      %p127 = scmp.ne.s32.totalorder %s119, %s121
      %p128 = scmp.eq.s32.totalorder %s34, 1
      %p129 = por %p127, %p128
      %p130 = scmp.ne.s32.totalorder %s121, %s122
      %p131 = scmp.eq.s32.totalorder %s34, 0
      %p132 = por %p130, %p131
      %p133 = scmp.ne.s32.totalorder %s121, %s122
      %p134 = scmp.eq.s32.totalorder %s35, 1
      %p135 = por %p133, %p134
      %p137 = scmp.ne.s32.totalorder %s122, %s136
      %p138 = scmp.eq.s32.totalorder %s35, 0
      %p139 = por %p137, %p138
      %s141 = sadd.s32 %s140, 1
      %p144 = scmp.eq.s32.totalorder %s29, 1
      %p145 = scmp.ne.s32.totalorder %s140, %s142
      %p146 = scmp.eq.s32.totalorder %s29, 0
      %p147 = por %p145, %p146
      %p148 = scmp.ne.s32.totalorder %s140, %s142
      %p149 = scmp.eq.s32.totalorder %s34, 1
      %p150 = por %p148, %p149
      %p151 = scmp.ne.s32.totalorder %s142, %s143
      %p152 = scmp.eq.s32.totalorder %s34, 0
      %p153 = por %p151, %p152
      %p154 = scmp.ne.s32.totalorder %s142, %s143
      %p155 = scmp.eq.s32.totalorder %s35, 1
      %p156 = por %p154, %p155
      %p158 = scmp.ne.s32.totalorder %s143, %s157
      %p159 = scmp.eq.s32.totalorder %s35, 0
      %p160 = por %p158, %p159
      %s161 = ssub.s32 %s36, %s48
      %s162 = ssub.s32 %s37, %s44
      %s163 = sor.u32 %s161, %s162
      %p164 = scmp.eq.s32.totalorder %s163, 0
      %s166 = sadd.s32 %s165, 1
      %s167 = scalar_select %p164, %s165, %s166
      %p170 = pneg %p164
      %p171 = scmp.eq.s32.totalorder %s29, 1
      %p172 = por %p170, %p171
      %p173 = scmp.ne.s32.totalorder %s165, %s168
      %p174 = scmp.eq.s32.totalorder %s29, 0
      %p175 = por %p173, %p174
      %p176 = scmp.ne.s32.totalorder %s165, %s168
      %p177 = scmp.eq.s32.totalorder %s34, 1
      %p178 = por %p176, %p177
      %p179 = scmp.ne.s32.totalorder %s168, %s169
      %p180 = scmp.eq.s32.totalorder %s34, 0
      %p181 = por %p179, %p180
      %p182 = scmp.ne.s32.totalorder %s168, %s169
      %p183 = scmp.eq.s32.totalorder %s35, 1
      %p184 = por %p182, %p183
      %p186 = scmp.ne.s32.totalorder %s169, %s185
      %p187 = scmp.eq.s32.totalorder %s35, 0
      %p188 = por %p186, %p187
      %s189 = ssub.s32 %s36, %s48
      %s190 = ssub.s32 %s37, %s44
      %s191 = sor.u32 %s189, %s190
      %p192 = scmp.eq.s32.totalorder %s191, 0
      %s194 = sadd.s32 %s193, 1
      %s195 = scalar_select %p192, %s193, %s194
      %p198 = pneg %p192
      %p199 = scmp.eq.s32.totalorder %s29, 1
      %p200 = por %p198, %p199
      %p201 = scmp.ne.s32.totalorder %s193, %s196
      %p202 = scmp.eq.s32.totalorder %s29, 0
      %p203 = por %p201, %p202
      %p204 = scmp.ne.s32.totalorder %s193, %s196
      %p205 = scmp.eq.s32.totalorder %s34, 1
      %p206 = por %p204, %p205
      %p207 = scmp.ne.s32.totalorder %s196, %s197
      %p208 = scmp.eq.s32.totalorder %s34, 0
      %p209 = por %p207, %p208
      %p210 = scmp.ne.s32.totalorder %s196, %s197
      %p211 = scmp.eq.s32.totalorder %s35, 1
      %p212 = por %p210, %p211
      %p214 = scmp.ne.s32.totalorder %s197, %s213
      %p215 = scmp.eq.s32.totalorder %s35, 0
      %p216 = por %p214, %p215
      %s217 = ssub.s32 %s36, %s48
      %s218 = ssub.s32 %s37, %s44
      %s219 = sor.u32 %s217, %s218
      %p220 = scmp.eq.s32.totalorder %s219, 0
      %s222 = sadd.s32 %s221, 1
      %s223 = scalar_select %p220, %s221, %s222
      %p226 = pneg %p220
      %p227 = scmp.eq.s32.totalorder %s29, 1
      %p228 = por %p226, %p227
      %p229 = scmp.ne.s32.totalorder %s221, %s224
      %p230 = scmp.eq.s32.totalorder %s29, 0
      %p231 = por %p229, %p230
      %p232 = scmp.ne.s32.totalorder %s221, %s224
      %p233 = scmp.eq.s32.totalorder %s34, 1
      %p234 = por %p232, %p233
      %p235 = scmp.ne.s32.totalorder %s224, %s225
      %p236 = scmp.eq.s32.totalorder %s34, 0
      %p237 = por %p235, %p236
      %p238 = scmp.ne.s32.totalorder %s224, %s225
      %p239 = scmp.eq.s32.totalorder %s35, 1
      %p240 = por %p238, %p239
      %p242 = scmp.ne.s32.totalorder %s225, %s241
      %p243 = scmp.eq.s32.totalorder %s35, 0
      %p244 = por %p242, %p243
      %s245 = ssub.s32 %s36, %s48
      %s246 = ssub.s32 %s37, %s44
      %s247 = sor.u32 %s245, %s246
      %p248 = scmp.eq.s32.totalorder %s247, 0
      %s250 = sadd.s32 %s249, 1
      %s251 = scalar_select %p248, %s249, %s250
      %p254 = pneg %p248
      %p255 = scmp.eq.s32.totalorder %s29, 1
      %p256 = por %p254, %p255
      %p257 = scmp.ne.s32.totalorder %s249, %s252
      %p258 = scmp.eq.s32.totalorder %s29, 0
      %p259 = por %p257, %p258
      %p260 = scmp.ne.s32.totalorder %s249, %s252
      %p261 = scmp.eq.s32.totalorder %s34, 1
      %p262 = por %p260, %p261
      %p263 = scmp.ne.s32.totalorder %s252, %s253
      %p264 = scmp.eq.s32.totalorder %s34, 0
      %p265 = por %p263, %p264
      %p266 = scmp.ne.s32.totalorder %s252, %s253
      %p267 = scmp.eq.s32.totalorder %s35, 1
      %p268 = por %p266, %p267
      %p270 = scmp.ne.s32.totalorder %s253, %s269
      %p271 = scmp.eq.s32.totalorder %s35, 0
      %p272 = por %p270, %p271
      %p273 = scmp.le.s32.totalorder 1, %s29
      %p274 = scmp.lt.s32.totalorder %s29, 3
      %p275 = pnand %p273, %p274
      %p276 = pneg %p275
      // Predicated region
      $region9: #{tpu_custom_call.1} parent=5 // pred_check
        _
      $region10: #{tpu_custom_call.1} parent=5 // pred_check_branch
        %278 = sbr.rel (%p275) target = $region12
      $region11: #{tpu_custom_call.1} parent=5 // pred_region
        %s279 = ssub.s32 %s29, 1
        // Predicated region
        $region13: #{tpu_custom_call.1} parent=11 // pred_check
          %p280 = pneg %p90
        $region14: #{tpu_custom_call.1} parent=11 // pred_check_branch
          %282 = sbr.rel (%p280) target = $region16
        $region15: #{tpu_custom_call.1} parent=11 // pred_region
          %s284 = ssub.s32 16, 16
          %285 = vsyncadd [#allocation6], %s284
          %s287 = sshll.u32 [#allocation5], 4
          %s288 = int_to_ptr.vmem [resolvable:$true] %s287
          %290 = dma.hbm_to_vmem [thread:$0]  %s1, 16, %s288, [#allocation6]
        $region16: #{tpu_custom_call.1} parent=11 // pred_fallthru
          _
        // Predicated region
        $region17: #{tpu_custom_call.1} parent=11 // pred_check
          %p291 = pneg %p111
        $region18: #{tpu_custom_call.1} parent=11 // pred_check_branch
          %293 = sbr.rel (%p291) target = $region20
        $region19: #{tpu_custom_call.1} parent=11 // pred_region
          %s295 = ssub.s32 16, 16
          %296 = vsyncadd [#allocation6], %s295
          %s298 = sshll.u32 [#allocation7], 4
          %s299 = int_to_ptr.vmem [resolvable:$true] %s298
          %301 = dma.hbm_to_vmem [thread:$0]  %s2, 16, %s299, [#allocation6]
        $region20: #{tpu_custom_call.1} parent=11 // pred_fallthru
          _
        // Predicated region
        $region21: #{tpu_custom_call.1} parent=11 // pred_check
          %p302 = pneg %p132
        $region22: #{tpu_custom_call.1} parent=11 // pred_check_branch
          %304 = sbr.rel (%p302) target = $region24
        $region23: #{tpu_custom_call.1} parent=11 // pred_region
          %s306 = ssub.s32 256, 256
          %307 = vsyncadd [#allocation9], %s306
          %s308 = sshll.u32 [#allocation8], 4
          %s309 = int_to_ptr.vmem [resolvable:$true] %s308
          %314 = dma.hbm_to_vmem [thread:$0]  %s3, 256, %s309, [#allocation9], 64, 64, 4
        $region24: #{tpu_custom_call.1} parent=11 // pred_fallthru
          _
        // Predicated region
        $region25: #{tpu_custom_call.1} parent=11 // pred_check
          %p315 = pneg %p153
        $region26: #{tpu_custom_call.1} parent=11 // pred_check_branch
          %317 = sbr.rel (%p315) target = $region28
        $region27: #{tpu_custom_call.1} parent=11 // pred_region
          %s319 = ssub.s32 16, 16
          %320 = vsyncadd [#allocation9], %s319
          %s322 = sshll.u32 [#allocation10], 4
          %s323 = int_to_ptr.vmem [resolvable:$true] %s322
          %325 = dma.hbm_to_vmem [thread:$0]  %s4, 16, %s323, [#allocation9]
        $region28: #{tpu_custom_call.1} parent=11 // pred_fallthru
          _
      $region12: #{tpu_custom_call.1} parent=5 // pred_fallthru
        _
      %p326 = scmp.lt.s32.totalorder %s29, 2
      // Predicated region
      $region29: #{tpu_custom_call.1} parent=5 // pred_check
        %p327 = pneg %p326
      $region30: #{tpu_custom_call.1} parent=5 // pred_check_branch
        %329 = sbr.rel (%p327) target = $region32
      $region31: #{tpu_custom_call.1} parent=5 // pred_region
        // Predicated region
        $region33: #{tpu_custom_call.1} parent=31 // pred_check
          %p330 = pneg %p63
        $region34: #{tpu_custom_call.1} parent=31 // pred_check_branch
          %332 = sbr.rel (%p330) target = $region36
        $region35: #{tpu_custom_call.1} parent=31 // pred_region
          %s333 = sand.u32 %s53, 1
          %s334 = scalar_lea.sflag [#allocation3], %s333
          %s335 = sand.u32 %s53, 1
          %s336 = smul.addr %s335, 8
          %s337 = scalar_lea.vmem [#allocation2], %s336
          %s339 = ssub.s32 128, 128
          %340 = vsyncadd %s334, %s339
          %s341 = sadd.s32 %s37, %s36
          %s342 = smul.addr %s341, 128
          %s343 = scalar_lea.hbm %s0, %s342
          %s345 = sshll.u32 %s337, 4
          %s346 = int_to_ptr.vmem [resolvable:$true] %s345
          %348 = dma.hbm_to_vmem [thread:$0]  %s343, 128, %s346, %s334
        $region36: #{tpu_custom_call.1} parent=31 // pred_fallthru
          _
      $region32: #{tpu_custom_call.1} parent=5 // pred_fallthru
        _
      %p349 = scmp.le.s32.totalorder 1, %s29
      %p350 = scmp.lt.s32.totalorder %s29, 3
      %p351 = pnand %p349, %p350
      %p352 = pneg %p351
      // Predicated region
      $region37: #{tpu_custom_call.1} parent=5 // pred_check
        _
      $region38: #{tpu_custom_call.1} parent=5 // pred_check_branch
        %354 = sbr.rel (%p351) target = $region40
      $region39: #{tpu_custom_call.1} parent=5 // pred_region
        %s355 = ssub.s32 %s29, 1
        %s356 = sand.u32 %s56, 1
        %s357 = scalar_lea.sflag [#allocation3], %s356
        %s358 = sand.u32 %s56, 1
        %s359 = smul.addr %s358, 8
        %s360 = scalar_lea.vmem [#allocation2], %s359
        // Predicated region
        $region41: #{tpu_custom_call.1} parent=39 // pred_check
          %p361 = pneg %p69
        $region42: #{tpu_custom_call.1} parent=39 // pred_check_branch
          %363 = sbr.rel (%p361) target = $region44
        $region43: #{tpu_custom_call.1} parent=39 // pred_region
          %364 = dma.done %s357, 128
        $region44: #{tpu_custom_call.1} parent=39 // pred_fallthru
          _
        // Predicated region
        $region45: #{tpu_custom_call.1} parent=39 // pred_check
          %p365 = pneg %p90
        $region46: #{tpu_custom_call.1} parent=39 // pred_check_branch
          %367 = sbr.rel (%p365) target = $region48
        $region47: #{tpu_custom_call.1} parent=39 // pred_region
          %368 = dma.done [#allocation6], 16
        $region48: #{tpu_custom_call.1} parent=39 // pred_fallthru
          _
        // Predicated region
        $region49: #{tpu_custom_call.1} parent=39 // pred_check
          %p369 = pneg %p111
        $region50: #{tpu_custom_call.1} parent=39 // pred_check_branch
          %371 = sbr.rel (%p369) target = $region52
        $region51: #{tpu_custom_call.1} parent=39 // pred_region
          %372 = dma.done [#allocation6], 16
        $region52: #{tpu_custom_call.1} parent=39 // pred_fallthru
          _
        // Predicated region
        $region53: #{tpu_custom_call.1} parent=39 // pred_check
          %p373 = pneg %p132
        $region54: #{tpu_custom_call.1} parent=39 // pred_check_branch
          %375 = sbr.rel (%p373) target = $region56
        $region55: #{tpu_custom_call.1} parent=39 // pred_region
          %376 = dma.done [#allocation9], 256
        $region56: #{tpu_custom_call.1} parent=39 // pred_fallthru
          _
        // Predicated region
        $region57: #{tpu_custom_call.1} parent=39 // pred_check
          %p377 = pneg %p153
        $region58: #{tpu_custom_call.1} parent=39 // pred_check_branch
          %379 = sbr.rel (%p377) target = $region60
        $region59: #{tpu_custom_call.1} parent=39 // pred_region
          %380 = dma.done [#allocation9], 16
        $region60: #{tpu_custom_call.1} parent=39 // pred_fallthru
          _
        %s381 = sand.u32 %s56, 1
        %s382 = scalar_lea.sflag [#allocation3], %s381
        %s383 = sand.u32 %s56, 1
        %s384 = smul.addr %s383, 8
        %s385 = scalar_lea.vmem [#allocation2], %s384
        %p386 = pneg %p69
        %p387 = pneg %p66
        %p388 = pneg %p90
        %p389 = pneg %p87
        %p390 = pneg %p111
        %p391 = pneg %p108
        %p392 = pneg %p132
        %p393 = pneg %p129
        %p394 = pneg %p153
        %p395 = pneg %p150
        %p396 = pneg %p181
        %p397 = pneg %p178
        %s398 = sand.u32 %s168, 1
        %s399 = scalar_lea.sflag [#allocation4], %s398
        %s400 = sand.u32 %s168, 1
        %s401 = smul.addr %s400, 8
        %s402 = scalar_lea.vmem [#allocation11], %s401
        %p403 = pneg %p209
        %p404 = pneg %p206
        %s405 = sand.u32 %s34, 1
        %s406 = scalar_lea.sflag [#allocation13], %s405
        %s407 = sand.u32 %s196, 1
        %s408 = smul.addr %s407, 16
        %s409 = scalar_lea.vmem [#allocation12], %s408
        %p410 = pneg %p237
        %p411 = pneg %p234
        %s412 = sand.u32 %s34, 1
        %s413 = scalar_lea.sflag [#allocation13], %s412
        %s414 = sand.u32 %s224, 1
        %s415 = smul.addr %s414, 16
        %s416 = scalar_lea.vmem [#allocation14], %s415
        %p417 = pneg %p265
        %p418 = pneg %p262
        %s419 = sand.u32 %s252, 1
        %s420 = scalar_lea.sflag [#allocation16], %s419
        %s421 = sand.u32 %s252, 1
        %s422 = smul.addr %s421, 16
        %s423 = scalar_lea.vmem [#allocation15], %s422
        %v425 = vld [vmem:[%s360] sm:$0xff]
        %v426 = vld [vmem:[#allocation5] sm:$0x1]
        %v427 = vld [vmem:[#allocation7] sm:$0x1]
        %vm428 = vcmask 261120
        %v429 = vsel %vm428, %v425, 0.0
        %430 = vadd.xlane.f32.xlu0 %v429
        %v431 = vpop.xlane.xlu0 %430
        %v432 = vrcp.pop 32.0
        %v433 = vmul.f32 %v431, %v432
        %v434 = vsub.f32 %v425, %v433
        %v435 = vmul.f32 %v434, %v434
        %v436 = vsel %vm428, %v435, 0.0
        %437 = vadd.xlane.f32.xlu0 %v436
        %v438 = vpop.xlane.xlu0 %437
        %v439 = vmul.f32 %v438, %v432
        %v440 = vadd.f32 %v439, 1e-05
        %v441 = vrsqrt.pop %v440
        %v442 = vmul.f32 %v434, %v441
        %v444 = vlaneseq
        %v445 = vshrl.u32 %v444, 7
        %v446 = vsub.s32 0, %v445
        %v447 = vrot.slane %v426, %v446
        %v449 = vmul.f32 %v442, %v447
        %v451 = vlaneseq
        %v452 = vshrl.u32 %v451, 7
        %v453 = vsub.s32 0, %v452
        %v454 = vrot.slane %v427, %v453
        %v456 = vadd.f32 %v449, %v454
        %457 = vst.msk [vmem:[%s402] sm:$0xff] %vm428, %v456
        %v458 = vpack.c.bf16 %v456, %v456
        %v459 = vld [vmem:[#allocation8] sm:$0xf]
        %v460 = vld [vmem:[#allocation8 + $0x4] sm:$0xf]
        %v461 = vld [vmem:[#allocation8 + $0x8] sm:$0xf]
        %v462 = vld [vmem:[#allocation8 + $0xc] sm:$0xf]
        %v463 = vld [vmem:[#allocation10] sm:$0x1]
        %v465 = vlaneseq
        %v466 = vshrl.u32 %v465, 7
        %v467 = vsub.s32 0, %v466
        %v468 = vrot.slane %v463, %v467
        %v474 = vunpack.c.l.b16 %v459
        %v475 = vunpack.c.l.b16 %v460
        %v476 = vunpack.c.l.b16 %v461
        %v477 = vunpack.c.l.b16 %v462
        %v478 = vpack.c.b16 %v475, %v474
        %v479 = vpack.c.b16 %v477, %v476
        %v483 = vsel %vm428, %v458, 0
        %485 = vmatprep.subr.bf16.mxu0 0
        %486 = vmatpush1.bf16.msra.mxu0 %v478
        %487 = vmatprep.subr.bf16.mxu0 0
        %488 = vmatpush1.bf16.msra.mxu0 %v479
        %489 = vmatprep.subr.bf16.mxu0 0
        %490 = vmatpush1.bf16.msra.mxu0 0
        %491 = vmatprep.subr.bf16.mxu0 0
        %492 = vmatpush1.bf16.msra.mxu0 0
        %493 = vmatprep.subr.bf16.mxu0 0
        %494 = vmatpush1.bf16.msra.mxu0 0
        %495 = vmatprep.subr.bf16.mxu0 0
        %496 = vmatpush1.bf16.msra.mxu0 0
        %497 = vmatprep.subr.bf16.mxu0 0
        %498 = vmatpush1.bf16.msra.mxu0 0
        %499 = vmatprep.subr.bf16.mxu0 0
        %500 = vmatpush1.bf16.msra.mxu0 0
        %501 = vmatprep.subr.bf16.mxu0 0
        %502 = vmatpush1.bf16.msra.mxu0 0
        %503 = vmatprep.subr.bf16.mxu0 0
        %504 = vmatpush1.bf16.msra.mxu0 0
        %505 = vmatprep.subr.bf16.mxu0 0
        %506 = vmatpush1.bf16.msra.mxu0 0
        %507 = vmatprep.subr.bf16.mxu0 0
        %508 = vmatpush1.bf16.msra.mxu0 0
        %509 = vmatprep.subr.bf16.mxu0 0
        %510 = vmatpush1.bf16.msra.mxu0 0
        %511 = vmatprep.subr.bf16.mxu0 0
        %512 = vmatpush1.bf16.msra.mxu0 0
        %513 = vmatprep.subr.bf16.mxu0 0
        %514 = vmatpush1.bf16.msra.mxu0 0
        %515 = vmatprep.subr.bf16.mxu0 0
        %516 = vmatpush1.bf16.msra.mxu0 0
        %517 = vmatprep.mubr.bf16.mxu0 0
        %518 = vmatmul.mubr.bf16.gmra.mrb[0].mxu0 %v483
        %v519 = vpop.f32.mrb[0].mxu0
        %v520 = vadd.f32 %v468, %v519
        %v521 = vpop.f32.mrb[0].mxu0
        %v522 = vpop.f32.mrb[0].mxu0
        %v523 = vpop.f32.mrb[0].mxu0
        %524 = vdwg.mxu0
        %v525 = vmul.f32 %v520, 0.35355338
        %v526 = vpack.c.bf16 %v525, %v525
        %v527 = vpack.c.bf16 %v520, %v520
        %vm528 = vcmask 60416
        %529 = vst.msk [vmem:[%s409] sm:$0xf] %vm528, %v526
        %v531 = vunpack.c.l.b16 %v527
        %v532 = vpack.c.b16 %v531, %v531
        %533 = vrot.lane.b32.xlu0 %v532, 96
        %v534 = vpop.permute.xlu0 %533
        %536 = vst.msk [vmem:[%s416] sm:$0xf] %vm528, %v534
        %537 = vrot.lane.b32.xlu0 %v532, 64
        %v538 = vpop.permute.xlu0 %537
        %540 = vst.msk [vmem:[%s423] sm:$0xf] %vm528, %v538
        %v542 = vunpack.c.l.b16 %v526
        %v543 = vpack.c.b16 %v542, %v542
        %544 = vrot.lane.b32.xlu0 %v543, 120
        %v545 = vpop.permute.xlu0 %544
        %s547 = scalar_lea.vmem %s409, 4 [#allocation12]
        %548 = vst.msk [vmem:[%s547] sm:$0xf] %vm528, %v545
        %549 = vrot.lane.b32.xlu0 %v532, 88
        %v550 = vpop.permute.xlu0 %549
        %s552 = scalar_lea.vmem %s416, 4 [#allocation14]
        %553 = vst.msk [vmem:[%s552] sm:$0xf] %vm528, %v550
        %554 = vrot.lane.b32.xlu0 %v532, 56
        %v555 = vpop.permute.xlu0 %554
        %s557 = scalar_lea.vmem %s423, 4 [#allocation15]
        %558 = vst.msk [vmem:[%s557] sm:$0xf] %vm528, %v555
        %559 = vrot.lane.b32.xlu0 %v543, 112
        %v560 = vpop.permute.xlu0 %559
        %s562 = scalar_lea.vmem %s409, 8 [#allocation12]
        %563 = vst.msk [vmem:[%s562] sm:$0xf] %vm528, %v560
        %564 = vrot.lane.b32.xlu0 %v532, 80
        %v565 = vpop.permute.xlu0 %564
        %s567 = scalar_lea.vmem %s416, 8 [#allocation14]
        %568 = vst.msk [vmem:[%s567] sm:$0xf] %vm528, %v565
        %569 = vrot.lane.b32.xlu0 %v532, 48
        %v570 = vpop.permute.xlu0 %569
        %s572 = scalar_lea.vmem %s423, 8 [#allocation15]
        %573 = vst.msk [vmem:[%s572] sm:$0xf] %vm528, %v570
        %574 = vrot.lane.b32.xlu0 %v543, 104
        %v575 = vpop.permute.xlu0 %574
        %s577 = scalar_lea.vmem %s409, 12 [#allocation12]
        %578 = vst.msk [vmem:[%s577] sm:$0xf] %vm528, %v575
        %579 = vrot.lane.b32.xlu0 %v532, 72
        %v580 = vpop.permute.xlu0 %579
        %s582 = scalar_lea.vmem %s416, 12 [#allocation14]
        %583 = vst.msk [vmem:[%s582] sm:$0xf] %vm528, %v580
        %584 = vrot.lane.b32.xlu0 %v532, 40
        %v585 = vpop.permute.xlu0 %584
        %s587 = scalar_lea.vmem %s423, 12 [#allocation15]
        %588 = vst.msk [vmem:[%s587] sm:$0xf] %vm528, %v585
        %s589 = sand.u32 %s168, 1
        %s590 = scalar_lea.sflag [#allocation4], %s589
        %s591 = sand.u32 %s168, 1
        %s592 = smul.addr %s591, 8
        %s593 = scalar_lea.vmem [#allocation11], %s592
        %s594 = sand.u32 %s34, 1
        %s595 = scalar_lea.sflag [#allocation13], %s594
        %s596 = sand.u32 %s196, 1
        %s597 = smul.addr %s596, 16
        %s598 = scalar_lea.vmem [#allocation12], %s597
        %s599 = sand.u32 %s34, 1
        %s600 = scalar_lea.sflag [#allocation13], %s599
        %s601 = sand.u32 %s224, 1
        %s602 = smul.addr %s601, 16
        %s603 = scalar_lea.vmem [#allocation14], %s602
        %s604 = sand.u32 %s252, 1
        %s605 = scalar_lea.sflag [#allocation16], %s604
        %s606 = sand.u32 %s252, 1
        %s607 = smul.addr %s606, 16
        %s608 = scalar_lea.vmem [#allocation15], %s607
        // Predicated region
        $region61: #{tpu_custom_call.1} parent=39 // pred_check
          %p609 = pneg %p178
        $region62: #{tpu_custom_call.1} parent=39 // pred_check_branch
          %611 = sbr.rel (%p609) target = $region64
        $region63: #{tpu_custom_call.1} parent=39 // pred_region
          %s613 = ssub.s32 128, 128
          %614 = vsyncadd %s590, %s613
          %s615 = sadd.s32 %s39, %s38
          %s616 = smul.addr %s615, 128
          %s617 = scalar_lea.hbm %s5, %s616
          %s619 = sshll.u32 %s593, 4
          %s620 = int_to_ptr.vmem [resolvable:$true] %s619
          %622 = dma.vmem_to_hbm [thread:$0]  %s620, 128, %s617, %s590
        $region64: #{tpu_custom_call.1} parent=39 // pred_fallthru
          _
        // Predicated region
        $region65: #{tpu_custom_call.1} parent=39 // pred_check
          %p623 = pneg %p206
        $region66: #{tpu_custom_call.1} parent=39 // pred_check_branch
          %625 = sbr.rel (%p623) target = $region68
        $region67: #{tpu_custom_call.1} parent=39 // pred_region
          %s627 = ssub.s32 256, 256
          %628 = vsyncadd %s595, %s627
          %s629 = smul.addr %s38, 4
          %s630 = sadd.s32 %s39, %s629
          %s631 = smul.addr %s630, 64
          %s632 = scalar_lea.hbm %s6, %s631
          %s633 = sshll.u32 %s598, 4
          %s634 = int_to_ptr.vmem [resolvable:$true] %s633
          %639 = dma.vmem_to_hbm [thread:$0]  %s634, 256, %s632, %s595, 64, 64, 4
        $region68: #{tpu_custom_call.1} parent=39 // pred_fallthru
          _
        // Predicated region
        $region69: #{tpu_custom_call.1} parent=39 // pred_check
          %p640 = pneg %p234
        $region70: #{tpu_custom_call.1} parent=39 // pred_check_branch
          %642 = sbr.rel (%p640) target = $region72
        $region71: #{tpu_custom_call.1} parent=39 // pred_region
          %s644 = ssub.s32 256, 256
          %645 = vsyncadd %s600, %s644
          %s646 = smul.addr %s38, 4
          %s647 = sadd.s32 %s39, %s646
          %s648 = smul.addr %s647, 64
          %s649 = scalar_lea.hbm %s7, %s648
          %s650 = sshll.u32 %s603, 4
          %s651 = int_to_ptr.vmem [resolvable:$true] %s650
          %656 = dma.vmem_to_hbm [thread:$0]  %s651, 256, %s649, %s600, 64, 64, 4
        $region72: #{tpu_custom_call.1} parent=39 // pred_fallthru
          _
        // Predicated region
        $region73: #{tpu_custom_call.1} parent=39 // pred_check
          %p657 = pneg %p262
        $region74: #{tpu_custom_call.1} parent=39 // pred_check_branch
          %659 = sbr.rel (%p657) target = $region76
        $region75: #{tpu_custom_call.1} parent=39 // pred_region
          %s661 = ssub.s32 256, 256
          %662 = vsyncadd %s605, %s661
          %s663 = smul.addr %s38, 4
          %s664 = sadd.s32 %s39, %s663
          %s665 = smul.addr %s664, 64
          %s666 = scalar_lea.hbm %s8, %s665
          %s667 = sshll.u32 %s608, 4
          %s668 = int_to_ptr.vmem [resolvable:$true] %s667
          %673 = dma.vmem_to_hbm [thread:$0]  %s668, 256, %s666, %s605, 64, 64, 4
        $region76: #{tpu_custom_call.1} parent=39 // pred_fallthru
          _
      $region40: #{tpu_custom_call.1} parent=5 // pred_fallthru
        _
      %p674 = scmp.le.s32.totalorder 2, %s29
      // Predicated region
      $region77: #{tpu_custom_call.1} parent=5 // pred_check
        %p675 = pneg %p674
      $region78: #{tpu_custom_call.1} parent=5 // pred_check_branch
        %677 = sbr.rel (%p675) target = $region80
      $region79: #{tpu_custom_call.1} parent=5 // pred_region
        %s678 = ssub.s32 %s29, 2
        // Predicated region
        $region81: #{tpu_custom_call.1} parent=79 // pred_check
          %p679 = pneg %p184
        $region82: #{tpu_custom_call.1} parent=79 // pred_check_branch
          %681 = sbr.rel (%p679) target = $region84
        $region83: #{tpu_custom_call.1} parent=79 // pred_region
          %s682 = sand.u32 %s169, 1
          %s683 = scalar_lea.sflag [#allocation4], %s682
          %s684 = sand.u32 %s169, 1
          %s685 = smul.addr %s684, 8
          %s686 = scalar_lea.vmem [#allocation11], %s685
          %687 = dma.done %s683, 128
        $region84: #{tpu_custom_call.1} parent=79 // pred_fallthru
          _
        // Predicated region
        $region85: #{tpu_custom_call.1} parent=79 // pred_check
          %p688 = pneg %p212
        $region86: #{tpu_custom_call.1} parent=79 // pred_check_branch
          %690 = sbr.rel (%p688) target = $region88
        $region87: #{tpu_custom_call.1} parent=79 // pred_region
          %s691 = sand.u32 %s35, 1
          %s692 = scalar_lea.sflag [#allocation13], %s691
          %s693 = sand.u32 %s197, 1
          %s694 = smul.addr %s693, 16
          %s695 = scalar_lea.vmem [#allocation12], %s694
          %696 = dma.done %s692, 256
        $region88: #{tpu_custom_call.1} parent=79 // pred_fallthru
          _
        // Predicated region
        $region89: #{tpu_custom_call.1} parent=79 // pred_check
          %p697 = pneg %p240
        $region90: #{tpu_custom_call.1} parent=79 // pred_check_branch
          %699 = sbr.rel (%p697) target = $region92
        $region91: #{tpu_custom_call.1} parent=79 // pred_region
          %s700 = sand.u32 %s35, 1
          %s701 = scalar_lea.sflag [#allocation13], %s700
          %s702 = sand.u32 %s225, 1
          %s703 = smul.addr %s702, 16
          %s704 = scalar_lea.vmem [#allocation14], %s703
          %705 = dma.done %s701, 256
        $region92: #{tpu_custom_call.1} parent=79 // pred_fallthru
          _
        // Predicated region
        $region93: #{tpu_custom_call.1} parent=79 // pred_check
          %p706 = pneg %p268
        $region94: #{tpu_custom_call.1} parent=79 // pred_check_branch
          %708 = sbr.rel (%p706) target = $region96
        $region95: #{tpu_custom_call.1} parent=79 // pred_region
          %s709 = sand.u32 %s253, 1
          %s710 = scalar_lea.sflag [#allocation16], %s709
          %s711 = sand.u32 %s253, 1
          %s712 = smul.addr %s711, 16
          %s713 = scalar_lea.vmem [#allocation15], %s712
          %714 = dma.done %s710, 256
        $region96: #{tpu_custom_call.1} parent=79 // pred_fallthru
          _
      $region80: #{tpu_custom_call.1} parent=5 // pred_fallthru
        _
    $region6: #{tpu_custom_call.1} parent=1 // loop_footer
      %s33 = sadd.s32 1, %s29
    $region7: #{tpu_custom_call.1} parent=1 // loop_footer_branch
      %28 = sbr.rel target = $region3
    $region8: #{tpu_custom_call.1} parent=1 // loop_exit
      _
    %715 = vsyncpa [#allocation3], 1
    %s716 = scalar_lea.sflag [#allocation3], 1
    %717 = vsyncpa %s716, 1
    %718 = vsyncpa [#allocation6], 1
    %719 = vsyncpa [#allocation9], 1
    %720 = vsyncpa [#allocation4], 1
    %s721 = scalar_lea.sflag [#allocation4], 1
    %722 = vsyncpa %s721, 1
    %723 = vsyncpa [#allocation13], 1
    %s724 = scalar_lea.sflag [#allocation13], 1
    %725 = vsyncpa %s724, 1
    %726 = vsyncpa [#allocation16], 1
    %s727 = scalar_lea.sflag [#allocation16], 1
    %728 = vsyncpa %s727, 1

</llo_original>
